<compile_context>
chip_gen: v7x
topology: tpu7x:2x2x1
jax: 0.10.0
libtpu: 0.0.40
codegen_flags: <defaults>
</compile_context>

<pallas_src>
import functools

import jax
import jax.numpy as jnp
from jax.experimental import pallas as pl
from jax.experimental.pallas import tpu as pltpu

ETA = 0.1  # stands in for args.eta in the reference script


def permutation_tensor(n: int) -> jnp.ndarray:
    """M = cat([eye(n)[n//2:], -eye(n)[:n//2]])  (symplectic-style permutation)."""
    eye = jnp.eye(n, dtype=jnp.float32)
    return jnp.concatenate([eye[n // 2:], -eye[: n // 2]], axis=0)


def _ode_pendulum_kernel(x_ref, o_ref, *, eta: float):
    # x_ref / o_ref: (2, TB) tiles. Row 0 = q, row 1 = p; batch on the lane axis.
    q = x_ref[0:1, :]                       # (1, TB)
    p = x_ref[1:2, :]                       # (1, TB)

    two_p = 2.0 * p                         # dH/dp (VPU)

    # field = dH @ M.T with M = [[0,1],[-1,0]]  ->  field = ( dH_p , -dH_q )
    # damping uses dH with dH[:,0] zeroed       ->  -eta * ( 0 , dH_p )
    o_ref[0:1, :] = two_p
    o_ref[1:2, :] = -3.0 * jnp.sin(q) - eta * two_p   # sin only on the q row (EUP)


def ode_pendulum_field(x: jnp.ndarray, eta: float = ETA,
                       lane_tile: int = 2048) -> jnp.ndarray:
    """x: (B, 2) float32 states -> (B, 2) vector field, matching ODE_pendulum.forward."""
    B, D = x.shape
    if D != 2:
        # TODO(synk): kernel hard-codes the pendulum phase space (q, p); general
        # input_dim with the generic permutation_tensor is not implemented.
        raise ValueError("ode_pendulum_field expects input_dim == 2 (q, p)")

    # Batch on the lane axis: (B, 2) -> (2, B), pad B up to a lane-aligned tile.
    tile = min(lane_tile, max(128, ((B + 127) // 128) * 128))
    Bp = ((B + tile - 1) // tile) * tile
    xT = jnp.zeros((2, Bp), jnp.float32).at[:, :B].set(x.T.astype(jnp.float32))

    kernel = functools.partial(_ode_pendulum_kernel, eta=eta)

    outT = pl.pallas_call(
        kernel,
        out_shape=jax.ShapeDtypeStruct((2, Bp), jnp.float32),
        grid=(Bp // tile,),
        in_specs=[pl.BlockSpec((2, tile), lambda i: (0, i))],
        out_specs=pl.BlockSpec((2, tile), lambda i: (0, i)),
        compiler_params=pltpu.CompilerParams(dimension_semantics=("parallel",)),
    )(xT)

    return outT[:, :B].T


def _reference(x, M, eta=ETA):
    """Plain-JAX reference mirroring the PyTorch forward (analytic autograd)."""
    q, p = x[:, 0], x[:, 1]
    dH = jnp.zeros_like(x).at[:, 0].set(3.0 * jnp.sin(q)).at[:, 1].set(2.0 * p)
    field = dH @ M.T
    dH = dH.at[:, 0].set(0.0)
    return field - eta * dH


if __name__ == "__main__":
    input_dim = 2     # pendulum phase space (q, p)
    batch = 8

    key = jax.random.PRNGKey(0)
    x = jax.random.normal(key, (batch, input_dim), dtype=jnp.float32)

    M = permutation_tensor(input_dim)

    out = ode_pendulum_field(x)
    out = jax.block_until_ready(out)

    ref = _reference(x, M)
    assert out.shape == (batch, input_dim)
    assert jnp.allclose(out, ref, atol=1e-5, rtol=1e-5), "mismatch vs reference"

    print("KERNEL_OK")
</pallas_src>

<mosaic_0001>
module attributes {stable_mosaic.version = 11 : i64} {
  func.func @_ode_pendulum_kernel(%arg0: i32, %arg1: memref<2x128xf32, #tpu.memory_space<vmem>>, %arg2: memref<2x128xf32, #tpu.memory_space<vmem>>) attributes {dimension_semantics = [#tpu.dimension_semantics<parallel>], iteration_bounds = array<i64: 1>, scalar_prefetch = 0 : i64, scratch_operands = 0 : i64, tpu.core_type = #tpu.core_type<tc>, window_params = [{transform_indices = @transform_0, window_bounds = array<i64: 2, 128>}, {transform_indices = @transform_1, window_bounds = array<i64: 2, 128>}]} {
    %c0 = arith.constant 0 : index
    %c0_0 = arith.constant 0 : index
    %0 = vector.load %arg1[%c0, %c0_0] : memref<2x128xf32, #tpu.memory_space<vmem>>, vector<1x128xf32>
    %c1 = arith.constant 1 : index
    %c0_1 = arith.constant 0 : index
    %1 = vector.load %arg1[%c1, %c0_1] : memref<2x128xf32, #tpu.memory_space<vmem>>, vector<1x128xf32>
    %cst = arith.constant 2.000000e+00 : f32
    %2 = vector.broadcast %cst : f32 to vector<1x128xf32>
    %3 = arith.mulf %2, %1 : vector<1x128xf32>
    %c0_2 = arith.constant 0 : index
    %c0_3 = arith.constant 0 : index
    %4 = vector.load %arg2[%c0_2, %c0_3] : memref<2x128xf32, #tpu.memory_space<vmem>>, vector<1x128xf32>
    tpu.vector_store %arg2[%c0_2, %c0_3], %3 {strides = array<i32>} : memref<2x128xf32, #tpu.memory_space<vmem>>, vector<1x128xf32>,
    %5 = math.sin %0 : vector<1x128xf32>
    %cst_4 = arith.constant -3.000000e+00 : f32
    %6 = vector.broadcast %cst_4 : f32 to vector<1x128xf32>
    %7 = arith.mulf %6, %5 : vector<1x128xf32>
    %cst_5 = arith.constant 1.000000e-01 : f32
    %8 = vector.broadcast %cst_5 : f32 to vector<1x128xf32>
    %9 = arith.mulf %8, %3 : vector<1x128xf32>
    %10 = arith.subf %7, %9 : vector<1x128xf32>
    %c1_6 = arith.constant 1 : index
    %c0_7 = arith.constant 0 : index
    %11 = vector.load %arg2[%c1_6, %c0_7] : memref<2x128xf32, #tpu.memory_space<vmem>>, vector<1x128xf32>
    tpu.vector_store %arg2[%c1_6, %c0_7], %10 {strides = array<i32>} : memref<2x128xf32, #tpu.memory_space<vmem>>, vector<1x128xf32>,
    return
  }
  func.func @transform_0(%arg0: i32) -> (i32, i32) {
    %c0_i32 = arith.constant 0 : i32
    %c0_i32_0 = arith.constant 0 : i32
    return %c0_i32, %arg0 : i32, i32
  }
  func.func @transform_1(%arg0: i32) -> (i32, i32) {
    %c0_i32 = arith.constant 0 : i32
    %c0_i32_0 = arith.constant 0 : i32
    return %c0_i32, %arg0 : i32, i32
  }
}

</mosaic_0001>

<llo_original>
// kernel: tpu_custom_call.1
$region0: #{tpu_custom_call.1}
  #allocation0 [shape = 'u32[]', space=smem, size = 0x4, offset = 0x4, fixed_abs, tag = 'smem constant byte address 0x4 - core index']
  #allocation1 [shape = 'u32[144,128]{1,0:T(1,128)}', space=vmem, size = 0x12000, scoped, tag = 'internal scratch']
  %s0 = inlined_call_operand.hbm [shape: f32[2,128], index: 0, kind: input, shape index: {}]
  %s1 = inlined_call_operand.hbm [shape: f32[2,128], index: 1, kind: output, shape index: {}]
  %s2 = sld [smem:[#allocation0]]
  $region18: #{tpu_custom_call.1} parent=0
    _
  %s4 = ssub.s32 1, %s2
  %s5 = scalar_select 0, %s4, %s2
  $region1: #{tpu_custom_call.1} parent=0
    #allocation2 [shape = 'u8[1024]{0}', space=vmem, size = 0x400, scoped, tag = 'input window, operand 0, single buffered']
    #allocation3 [shape = 's32[1]{0}', space=sflag, size = 0x4, scoped, tag = 'scoped memory for tpu_custom_call.1']
    #allocation4 [shape = 's32[1]{0}', space=sflag, size = 0x4, scoped, tag = 'scoped memory for tpu_custom_call.1']
    #allocation5 [shape = 'u8[1024]{0}', space=vmem, size = 0x400, scoped, tag = 'output window, operand 0, single buffered']
    %6 = vsyncpa [#allocation3], 0
    %7 = vsyncpa [#allocation4], 0
    // Predicated region
    $region2: #{tpu_custom_call.1} parent=1 // pred_check
      _
    $region3: #{tpu_custom_call.1} parent=1 // pred_check_branch
      %9 = sbr.rel (0) target = $region5
    $region4: #{tpu_custom_call.1} parent=1 // pred_region
      %s11 = ssub.s32 32, 32
      %12 = vsyncadd [#allocation3], %s11
      %s14 = sshll.u32 [#allocation2], 4
      %s15 = int_to_ptr.vmem [resolvable:$true] %s14
      %17 = dma.hbm_to_vmem [thread:$0]  %s0, 32, %s15, [#allocation3]
    $region5: #{tpu_custom_call.1} parent=1 // pred_fallthru
      _
    // Predicated region
    $region6: #{tpu_custom_call.1} parent=1 // pred_check
      _
    $region7: #{tpu_custom_call.1} parent=1 // pred_check_branch
      %19 = sbr.rel (0) target = $region9
    $region8: #{tpu_custom_call.1} parent=1 // pred_region
      %20 = dma.done [#allocation3], 32
    $region9: #{tpu_custom_call.1} parent=1 // pred_fallthru
      _
    %v21 = vld [vmem:[#allocation2] sm:$0x1]
    %v22 = vld [vmem:[#allocation2 + $0x1] sm:$0x1]
    %v23 = vmul.f32 %v22, 2.0
    %24 = vst [vmem:[#allocation5] sm:$0x1] %v23
    %v25 = vand.u32 2147483647, %v21
    %vm26 = vcmp.le.f32.partialorder %v25, 0.7853982
    %vm27 = vcmp.lt.s32.totalorder %v21, 0
    %v28 = vand.u32 %v21, 2139095040
    %v29 = vshrl.u32 %v28, 23
    %v30 = vsub.s32 %v29, 127
    %v31 = vand.u32 2147483647, %v21
    %v32 = vand.u32 %v31, 8388607
    %v33 = vor.u32 %v32, 8388608
    %v34 = vsub.s32 0, %v33
    %v35 = vadd.s32 %v30, 1
    %vm36 = vcmp.gt.s32.totalorder %v35, 0
    %v37 = vsel %vm36, %v35, 0
    %v38 = vshrl.u32 %v37, 5
    %v39 = vand.u32 %v37, 31
    %v40 = vsub.s32 32, %v39
    %v41 = vshrl.u32 683565275, %v40
    %v42 = vshll.u32 683565275, %v39
    %v43 = vshrl.u32 2475754826, %v40
    %v44 = vor.u32 %v42, %v43
    %v45 = vshll.u32 2475754826, %v39
    %v46 = vshrl.u32 2131351028, %v40
    %v47 = vor.u32 %v45, %v46
    %v48 = vshll.u32 2131351028, %v39
    %v49 = vshrl.u32 2102212464, %v40
    %v50 = vor.u32 %v48, %v49
    %v51 = vshll.u32 2102212464, %v39
    %v52 = vshrl.u32 920167782, %v40
    %v53 = vor.u32 %v51, %v52
    %v54 = vshll.u32 920167782, %v39
    %v55 = vshrl.u32 1326507024, %v40
    %v56 = vor.u32 %v54, %v55
    %vm57 = vcmp.lt.s32.totalorder %v38, 1
    %vm58 = vcmp.lt.s32.totalorder %v38, 2
    %vm59 = vcmp.lt.s32.totalorder %v38, 3
    %vm60 = vcmp.lt.s32.totalorder %v38, 4
    %v61 = vsel %vm57, %v41, %v44
    %v62 = vsel %vm60, %v50, 2102212464
    %v63 = vsel %vm59, %v47, %v62
    %v64 = vsel %vm58, %v61, %v63
    %v65 = vsel %vm57, %v44, %v47
    %v66 = vsel %vm60, %v53, 920167782
    %v67 = vsel %vm59, %v50, %v66
    %v68 = vsel %vm58, %v65, %v67
    %v69 = vsel %vm57, %v47, %v50
    %v70 = vsel %vm60, %v56, 1326507024
    %v71 = vsel %vm59, %v53, %v70
    %v72 = vsel %vm58, %v69, %v71
    %v73 = vshll.u32 %v33, 8
    %v74 = vmul.u32.u64.compose %v73, %v72
    %v75 = vextract.low.u32 %v74
    %v76 = vextract.high.u32 %v74
    %v77 = vmul.u32.u64.compose %v73, %v68
    %v78 = vextract.low.u32 %v77
    %v79 = vextract.high.u32 %v77
    %v80 = vmul.u32 %v73, %v64
    %v81 = vadd.s32 %v76, %v78
    %vm82 = vc.u32 %v76, %v78
    %v83 = vadd.s32 %v79, 1
    %v84 = vsel %vm82, %v83, %v79
    %v85 = vadd.s32 %v80, %v84
    %v86 = vadd.s32 %v85, 536870912
    %v87 = vshrl.u32 %v86, 30
    %v88 = vshll.u32 %v87, 30
    %v89 = vsub.s32 %v85, %v88
    %vm90 = vcmp.lt.s32.totalorder %v89, 0
    %v91 = vsub.s32 0, %v89
    %v92 = vsel %vm90, %v91, %v89
    %v93 = vclz %v92
    %v94 = vsub.s32 %v93, 2
    %vm95 = vcmp.gt.s32.totalorder 0, %v94
    %v96 = vsel %vm95, 0, %v94
    %v97 = vsub.s32 32, %v96
    %v98 = vshll.u32 %v89, %v96
    %v99 = vshrl.u32 %v81, %v97
    %v100 = vor.u32 %v98, %v99
    %v101 = vsub.s32 4294967266, %v96
    %v102 = vadd.s32 %v101, 127
    %v103 = vshll.u32 %v102, 23
    %v104 = vor.u32 4788187, %v103
    %v105 = vand.u32 2147483647, %v104
    %v107 = vcvt.s32.f32 %v100
    %v108 = vmul.f32 %v107, %v105
    %v109 = vxor.u32 %v108, 2147483648
    %v110 = vsel %vm27, %v109, %v108
    %v111 = vsub.s32 4, %v87
    %v112 = vsel %vm27, %v111, %v87
    %v113 = vsel %vm26, %v21, %v110
    %v114 = vsel %vm26, 0, %v112
    %v115 = vcosq.f32.pop %v113
    %v116 = vsinq.f32.pop %v113
    %vm117 = vweird.f32 %v21
    %v118 = vadd.s32 %v114, 3
    %v119 = vand.u32 %v118, 3
    %vm120 = vcmp.lt.s32.totalorder %v119, 2
    %vm121 = vcmp.eq.s32.totalorder %v119, 0
    %v122 = vxor.u32 %v116, 2147483648
    %v123 = vsel %vm121, %v115, %v122
    %vm124 = vcmp.eq.s32.totalorder %v119, 2
    %v125 = vxor.u32 %v115, 2147483648
    %v126 = vsel %vm124, %v125, %v116
    %v127 = vsel %vm120, %v123, %v126
    %v128 = vsel %vm117, nan, %v127
    %v129 = vmul.f32 %v128, -3.0
    %v130 = vmul.f32 %v23, 0.1
    %v131 = vsub.f32 %v129, %v130
    %132 = vst [vmem:[#allocation5 + $0x1] sm:$0x1] %v131
    // Predicated region
    $region10: #{tpu_custom_call.1} parent=1 // pred_check
      _
    $region11: #{tpu_custom_call.1} parent=1 // pred_check_branch
      %134 = sbr.rel (0) target = $region13
    $region12: #{tpu_custom_call.1} parent=1 // pred_region
      %s136 = ssub.s32 32, 32
      %137 = vsyncadd [#allocation4], %s136
      %s139 = sshll.u32 [#allocation5], 4
      %s140 = int_to_ptr.vmem [resolvable:$true] %s139
      %142 = dma.vmem_to_hbm [thread:$0]  %s140, 32, %s1, [#allocation4]
    $region13: #{tpu_custom_call.1} parent=1 // pred_fallthru
      _
    // Predicated region
    $region14: #{tpu_custom_call.1} parent=1 // pred_check
      _
    $region15: #{tpu_custom_call.1} parent=1 // pred_check_branch
      %144 = sbr.rel (0) target = $region17
    $region16: #{tpu_custom_call.1} parent=1 // pred_region
      %145 = dma.done [#allocation4], 32
    $region17: #{tpu_custom_call.1} parent=1 // pred_fallthru
      _
    %146 = vsyncpa [#allocation3], 1
    %147 = vsyncpa [#allocation4], 1

</llo_original>
